<compile_context>
chip_gen: v6e
topology: v6e:2x2x1
jax: 0.10.0
libtpu: 0.0.40
codegen_flags: <defaults>
</compile_context>

<pallas_src>
import jax
import jax.numpy as jnp
from jax.experimental import pallas as pl
from jax.experimental.pallas import tpu as pltpu


# ---------------------------------------------------------------------------
# Fast path: small table fully resident in VMEM, single-step one-hot matmul.
# ---------------------------------------------------------------------------
def _embed_small_kernel(ids_ref, emb_ref, out_ref):
    """ids_ref: (N, 1) int32 in VMEM (N = B*L)
       emb_ref: (V, H) table fully resident in VMEM
       out_ref: (N, H) gathered embeddings
    """
    N = ids_ref.shape[0]
    V, _ = emb_ref.shape
    # Clamp out-of-range ids so a bad id can never index outside the table.
    ids = jnp.clip(ids_ref[...], 0, V - 1)                            # (N, 1)
    one_hot = (ids == jax.lax.broadcasted_iota(jnp.int32, (N, V), 1)
               ).astype(emb_ref.dtype)                                # (N, V)
    out_ref[...] = jnp.dot(
        one_hot, emb_ref[...], preferred_element_type=jnp.float32
    ).astype(out_ref.dtype)


# ---------------------------------------------------------------------------
# Fallback path: large vocab, HBM-resident table, per-row gather DMAs that
# land directly in the pipelined output block.
# ---------------------------------------------------------------------------
def _embed_gather_kernel(ids_ref, emb_hbm, out_ref, sem):
    """One grid step == one batch element.

    ids_ref: (B, L) int32, scalar-prefetched into SMEM
    emb_hbm: (V, H) table left in HBM (memory_space=pl.ANY)
    out_ref: (1, L, H) VMEM output block for batch element b
    sem    : single shared DMA semaphore
    """
    b = pl.program_id(0)
    L = out_ref.shape[1]
    V = emb_hbm.shape[0]

    # Issue all L row gathers before any wait so they overlap (all scalar id
    # reads happen before the first .wait(), keeping SMEM forwarding intact).
    # TODO(synk): for very large L, switch the unrolled issue loop to a
    # lax.fori_loop with a small ring of in-flight DMAs (issue depth 4-8).
    copies = []
    for l in range(L):                     # L is a compile-time constant
        tok = jnp.clip(ids_ref[b, l], 0, V - 1)
        cp = pltpu.make_async_copy(
            emb_hbm.at[pl.ds(tok, 1), :],      # one (1, H) row from HBM
            out_ref.at[0, pl.ds(l, 1), :],     # straight into the out block
            sem,
        )
        cp.start()
        copies.append(cp)
    for cp in copies:
        cp.wait()


def text_embedder_encode(ids, emb_weight, *, vmem_table_limit_bytes=4 << 20):
    """Pallas equivalent of TextEmbedder.forward / encode.

    ids:        (B, L) integer token ids
    emb_weight: (V, H) embedding table
    returns:    (B, H, L)  (== word_embeddings(x).transpose(-1, -2))
    """
    B, L = ids.shape
    V, H = emb_weight.shape
    ids = ids.astype(jnp.int32)
    table_bytes = V * H * emb_weight.dtype.itemsize

    if table_bytes <= vmem_table_limit_bytes:
        # Small table: VMEM-resident, single grid step for the whole batch.
        N = B * L
        flat = pl.pallas_call(
            _embed_small_kernel,
            out_shape=jax.ShapeDtypeStruct((N, H), emb_weight.dtype),
            in_specs=[
                pl.BlockSpec(memory_space=pltpu.MemorySpace.VMEM),
                pl.BlockSpec(memory_space=pltpu.MemorySpace.VMEM),
            ],
            out_specs=pl.BlockSpec(memory_space=pltpu.MemorySpace.VMEM),
        )(ids.reshape(N, 1), emb_weight)
        blh = flat.reshape(B, L, H)
    else:
        # Large table: HBM gather path.
        blh = pl.pallas_call(
            _embed_gather_kernel,
            out_shape=jax.ShapeDtypeStruct((B, L, H), emb_weight.dtype),
            grid_spec=pltpu.PrefetchScalarGridSpec(
                num_scalar_prefetch=1,                  # ids -> SMEM
                grid=(B,),
                in_specs=[pl.BlockSpec(memory_space=pl.ANY)],
                out_specs=pl.BlockSpec((1, L, H), lambda b, ids: (b, 0, 0)),
                scratch_shapes=[pltpu.SemaphoreType.DMA(())],
            ),
            compiler_params=pltpu.CompilerParams(
                dimension_semantics=("parallel",),      # batch-parallel
            ),
        )(ids, emb_weight)

    # Match the PyTorch forward layout (B, H, L).  Kept in the wrapper so the
    # kernel itself emits the H-on-lanes slab; drop this if the downstream
    # consumer can take (B, L, H).
    return jnp.transpose(blh, (0, 2, 1))


if __name__ == "__main__":
    # Module hyperparameters (small, consistent with __init__):
    vocab_size = 256
    hidden_size = 32
    sample_length = 8     # text_length
    batch = 2
    embedding_init_std = 0.02

    key = jax.random.PRNGKey(0)
    k_ids, k_w = jax.random.split(key)

    # Deterministic synthetic parameter init (no checkpoint load).
    word_embeddings_weight = (
        jax.random.normal(k_w, (vocab_size, hidden_size), dtype=jnp.float32)
        * embedding_init_std
    )

    # Token ids input, shape (B, L).
    x = jax.random.randint(
        k_ids, (batch, sample_length), 0, vocab_size, dtype=jnp.int32
    )

    out = jax.block_until_ready(text_embedder_encode(x, word_embeddings_weight))

    # Reference: embedding lookup then transpose(-1, -2).
    ref = jnp.transpose(jnp.take(word_embeddings_weight, x, axis=0), (0, 2, 1))

    assert out.shape == (batch, hidden_size, sample_length), out.shape
    assert out.dtype == jnp.float32
    assert jnp.allclose(out, ref, atol=1e-6, rtol=1e-6)

    # TODO(synk): `x.to(self.device)` is pure device placement; no Pallas equivalent needed.
    print("KERNEL_OK")
</pallas_src>

<mosaic_0001>
module attributes {stable_mosaic.version = 11 : i64} {
  func.func @_embed_small_kernel(%arg0: memref<16x1xi32, #tpu.memory_space<vmem>>, %arg1: memref<256x32xf32, #tpu.memory_space<vmem>>, %arg2: memref<16x32xf32, #tpu.memory_space<vmem>>) attributes {dimension_semantics = [], scalar_prefetch = 0 : i64, scratch_operands = 0 : i64, tpu.core_type = #tpu.core_type<tc>} {
    %c0 = arith.constant 0 : index
    %c0_0 = arith.constant 0 : index
    %0 = vector.load %arg0[%c0, %c0_0] : memref<16x1xi32, #tpu.memory_space<vmem>>, vector<16x1xi32>
    %c0_i32 = arith.constant 0 : i32
    %c255_i32 = arith.constant 255 : i32
    %1 = vector.broadcast %c0_i32 : i32 to vector<16x1xi32>
    %2 = arith.maxsi %1, %0 : vector<16x1xi32>
    %3 = vector.broadcast %c255_i32 : i32 to vector<16x1xi32>
    %4 = arith.minsi %3, %2 : vector<16x1xi32>
    %5 = tpu.iota {dimensions = array<i32: 1>} : vector<16x256xi32>
    %6 = vector.broadcast %4 : vector<16x1xi32> to vector<16x256xi32>
    %7 = arith.cmpi eq, %6, %5 : vector<16x256xi32>
    %8 = arith.extui %7 : vector<16x256xi1> to vector<16x256xi32>
    %9 = arith.sitofp %8 : vector<16x256xi32> to vector<16x256xf32>
    %c0_1 = arith.constant 0 : index
    %c0_2 = arith.constant 0 : index
    %10 = vector.load %arg1[%c0_1, %c0_2] : memref<256x32xf32, #tpu.memory_space<vmem>>, vector<256x32xf32>
    %cst = arith.constant dense<0.000000e+00> : vector<16x32xf32>
    %11 = tpu.matmul %9, %10, %cst {dimension_numbers = #tpu.dot_dimension_numbers<[1], [0], [0], [1], [0, 0, 1, 1], [], []>} : vector<16x256xf32>, vector<256x32xf32>, vector<16x32xf32> -> vector<16x32xf32>
    %c0_3 = arith.constant 0 : index
    %c0_4 = arith.constant 0 : index
    %12 = vector.load %arg2[%c0_3, %c0_4] : memref<16x32xf32, #tpu.memory_space<vmem>>, vector<16x32xf32>
    tpu.vector_store %arg2[%c0_3, %c0_4], %11 {strides = array<i32>} : memref<16x32xf32, #tpu.memory_space<vmem>>, vector<16x32xf32>,
    return
  }
}

</mosaic_0001>

<llo_original>
// kernel: tpu_custom_call.1
$region0: #{tpu_custom_call.1}
  #allocation0 [shape = 'u32[]', space=smem, size = 0x4, offset = 0x4, fixed_abs, tag = 'smem constant byte address 0x4 - core index']
  #allocation1 [shape = 'u32[144,128]{1,0:T(1,128)}', space=vmem, size = 0x12000, scoped, tag = 'internal scratch']
  %s0 = inlined_call_operand.vmem [shape: s32[16,1], index: 0, kind: input, shape index: {}]
  %s1 = inlined_call_operand.vmem [shape: f32[256,32], index: 1, kind: input, shape index: {}]
  %s2 = inlined_call_operand.hbm [shape: f32[16,32], index: 2, kind: output, shape index: {}]
  %s3 = sld [smem:[#allocation0]]
  $region18: #{tpu_custom_call.1} parent=0
    _
  %s5 = ssub.s32 1, %s3
  %s6 = scalar_select 0, %s5, %s3
  $region1: #{tpu_custom_call.1} parent=0
    #allocation2 [shape = 'u8[8192]{0}', space=vmem, size = 0x2000, scoped, tag = 'output window, operand 0, single buffered']
    #allocation3 [shape = 's32[1]{0}', space=sflag, size = 0x4, scoped, tag = 'scoped memory for tpu_custom_call.1']
    %7 = vsyncpa [#allocation3], 0
    // Predicated region
    $region2: #{tpu_custom_call.1} parent=1 // pred_check
      _
    $region3: #{tpu_custom_call.1} parent=1 // pred_check_branch
      %9 = sbr.rel (0) target = $region5
    $region4: #{tpu_custom_call.1} parent=1 // pred_region
      _
    $region5: #{tpu_custom_call.1} parent=1 // pred_fallthru
      _
    // Predicated region
    $region6: #{tpu_custom_call.1} parent=1 // pred_check
      _
    $region7: #{tpu_custom_call.1} parent=1 // pred_check_branch
      %11 = sbr.rel (0) target = $region9
    $region8: #{tpu_custom_call.1} parent=1 // pred_region
      _
    $region9: #{tpu_custom_call.1} parent=1 // pred_fallthru
      _
    %v12 = vld [vmem:[%s0] sm:$0xff]
    %v13 = vld [vmem:[%s0 + $0x8] sm:$0xff]
    %vm14 = vcmp.gt.s32.totalorder %v12, 0
    %v15 = vsel %vm14, %v12, 0
    %vm16 = vcmp.gt.s32.totalorder %v13, 0
    %v17 = vsel %vm16, %v13, 0
    %vm18 = vcmp.lt.s32.totalorder %v15, 255
    %v19 = vsel %vm18, %v15, 255
    %vm20 = vcmp.lt.s32.totalorder %v17, 255
    %v21 = vsel %vm20, %v17, 255
    %v22 = vlaneseq
    %v23 = vand.u32 %v22, 127
    %v24 = vadd.s32 %v23, 128
    %25 = vset.pattern.permute.xlu0 0
    %26 = vperm.xlu0 %25, %v19
    %v27 = vpop.permute.xlu0 %26
    %28 = vset.pattern.permute.xlu0 0
    %29 = vperm.xlu0 %28, %v21
    %v30 = vpop.permute.xlu0 %29
    %vm31 = vcmp.eq.s32.totalorder %v27, %v23
    %vm32 = vcmp.eq.s32.totalorder %v27, %v24
    %vm33 = vcmp.eq.s32.totalorder %v30, %v23
    %vm34 = vcmp.eq.s32.totalorder %v30, %v24
    %v35 = vsel %vm31, 1, 0
    %v36 = vsel %vm32, 1, 0
    %v37 = vsel %vm33, 1, 0
    %v38 = vsel %vm34, 1, 0
    %v39 = vcvt.s32.f32 %v35
    %v40 = vcvt.s32.f32 %v36
    %v41 = vcvt.s32.f32 %v37
    %v42 = vcvt.s32.f32 %v38
    %v43 = vld [vmem:[%s1] sm:$0xff]
    %v44 = vld [vmem:[%s1 + $0x8] sm:$0xff]
    %v45 = vld [vmem:[%s1 + $0x10] sm:$0xff]
    %v46 = vld [vmem:[%s1 + $0x18] sm:$0xff]
    %v47 = vld [vmem:[%s1 + $0x20] sm:$0xff]
    %v48 = vld [vmem:[%s1 + $0x28] sm:$0xff]
    %v49 = vld [vmem:[%s1 + $0x30] sm:$0xff]
    %v50 = vld [vmem:[%s1 + $0x38] sm:$0xff]
    %v51 = vld [vmem:[%s1 + $0x40] sm:$0xff]
    %v52 = vld [vmem:[%s1 + $0x48] sm:$0xff]
    %v53 = vld [vmem:[%s1 + $0x50] sm:$0xff]
    %v54 = vld [vmem:[%s1 + $0x58] sm:$0xff]
    %v55 = vld [vmem:[%s1 + $0x60] sm:$0xff]
    %v56 = vld [vmem:[%s1 + $0x68] sm:$0xff]
    %v57 = vld [vmem:[%s1 + $0x70] sm:$0xff]
    %v58 = vld [vmem:[%s1 + $0x78] sm:$0xff]
    %v59 = vld [vmem:[%s1 + $0x80] sm:$0xff]
    %v60 = vld [vmem:[%s1 + $0x88] sm:$0xff]
    %v61 = vld [vmem:[%s1 + $0x90] sm:$0xff]
    %v62 = vld [vmem:[%s1 + $0x98] sm:$0xff]
    %v63 = vld [vmem:[%s1 + $0xa0] sm:$0xff]
    %v64 = vld [vmem:[%s1 + $0xa8] sm:$0xff]
    %v65 = vld [vmem:[%s1 + $0xb0] sm:$0xff]
    %v66 = vld [vmem:[%s1 + $0xb8] sm:$0xff]
    %v67 = vld [vmem:[%s1 + $0xc0] sm:$0xff]
    %v68 = vld [vmem:[%s1 + $0xc8] sm:$0xff]
    %v69 = vld [vmem:[%s1 + $0xd0] sm:$0xff]
    %v70 = vld [vmem:[%s1 + $0xd8] sm:$0xff]
    %v71 = vld [vmem:[%s1 + $0xe0] sm:$0xff]
    %v72 = vld [vmem:[%s1 + $0xe8] sm:$0xff]
    %v73 = vld [vmem:[%s1 + $0xf0] sm:$0xff]
    %v74 = vld [vmem:[%s1 + $0xf8] sm:$0xff]
    %75 = vmatprep.subr.mxu0 0.0
    %76 = vmatpush1.msra.mxu0 %v58
    %77 = vmatprep.subr.mxu0 0.0
    %78 = vmatpush1.msra.mxu0 %v57
    %79 = vmatprep.subr.mxu0 0.0
    %80 = vmatpush1.msra.mxu0 %v56
    %81 = vmatprep.subr.mxu0 0.0
    %82 = vmatpush1.msra.mxu0 %v55
    %83 = vmatprep.subr.mxu0 0.0
    %84 = vmatpush1.msra.mxu0 %v54
    %85 = vmatprep.subr.mxu0 0.0
    %86 = vmatpush1.msra.mxu0 %v53
    %87 = vmatprep.subr.mxu0 0.0
    %88 = vmatpush1.msra.mxu0 %v52
    %89 = vmatprep.subr.mxu0 0.0
    %90 = vmatpush1.msra.mxu0 %v51
    %91 = vmatprep.subr.mxu0 0.0
    %92 = vmatpush1.msra.mxu0 %v50
    %93 = vmatprep.subr.mxu0 0.0
    %94 = vmatpush1.msra.mxu0 %v49
    %95 = vmatprep.subr.mxu0 0.0
    %96 = vmatpush1.msra.mxu0 %v48
    %97 = vmatprep.subr.mxu0 0.0
    %98 = vmatpush1.msra.mxu0 %v47
    %99 = vmatprep.subr.mxu0 0.0
    %100 = vmatpush1.msra.mxu0 %v46
    %101 = vmatprep.subr.mxu0 0.0
    %102 = vmatpush1.msra.mxu0 %v45
    %103 = vmatprep.subr.mxu0 0.0
    %104 = vmatpush1.msra.mxu0 %v44
    %105 = vmatprep.subr.mxu0 0.0
    %106 = vmatpush1.msra.mxu0 %v43
    %107 = vmatprep.subr.mxu0 0.0
    %108 = vmatpush2.msra.mxu0 %v74
    %109 = vmatprep.subr.mxu0 0.0
    %110 = vmatpush2.msra.mxu0 %v73
    %111 = vmatprep.subr.mxu0 0.0
    %112 = vmatpush2.msra.mxu0 %v72
    %113 = vmatprep.subr.mxu0 0.0
    %114 = vmatpush2.msra.mxu0 %v71
    %115 = vmatprep.subr.mxu0 0.0
    %116 = vmatpush2.msra.mxu0 %v70
    %117 = vmatprep.subr.mxu0 0.0
    %118 = vmatpush2.msra.mxu0 %v69
    %119 = vmatprep.subr.mxu0 0.0
    %120 = vmatpush2.msra.mxu0 %v68
    %121 = vmatprep.subr.mxu0 0.0
    %122 = vmatpush2.msra.mxu0 %v67
    %123 = vmatprep.subr.mxu0 0.0
    %124 = vmatpush2.msra.mxu0 %v66
    %125 = vmatprep.subr.mxu0 0.0
    %126 = vmatpush2.msra.mxu0 %v65
    %127 = vmatprep.subr.mxu0 0.0
    %128 = vmatpush2.msra.mxu0 %v64
    %129 = vmatprep.subr.mxu0 0.0
    %130 = vmatpush2.msra.mxu0 %v63
    %131 = vmatprep.subr.mxu0 0.0
    %132 = vmatpush2.msra.mxu0 %v62
    %133 = vmatprep.subr.mxu0 0.0
    %134 = vmatpush2.msra.mxu0 %v61
    %135 = vmatprep.subr.mxu0 0.0
    %136 = vmatpush2.msra.mxu0 %v60
    %137 = vmatprep.subr.mxu0 0.0
    %138 = vmatpush2.msra.mxu0 %v59
    %139 = vmatprep.mubr.f32.mxu0 %v40
    %140 = vmatmul.mubr.f32.gmra.mxu0 %v39
    %v141 = vpop.f32.mrf.mxu0
    %v142 = vadd.f32 0.0, %v141
    %v143 = vpop.f32.mrf.mxu0
    %144 = vmatprep.mubr.f32.mxu0 %v42
    %145 = vmatmul.mubr.f32.gmra.mxu0 %v41
    %v146 = vpop.f32.mrf.mxu0
    %v147 = vadd.f32 0.0, %v146
    %v148 = vpop.f32.mrf.mxu0
    %149 = vdwg.mxu0
    %vm150 = vcmask 261120
    %151 = vst.msk [vmem:[#allocation2] sm:$0xff] %vm150, %v142
    %152 = vst.msk [vmem:[#allocation2 + $0x8] sm:$0xff] %vm150, %v147
    // Predicated region
    $region10: #{tpu_custom_call.1} parent=1 // pred_check
      _
    $region11: #{tpu_custom_call.1} parent=1 // pred_check_branch
      %154 = sbr.rel (0) target = $region13
    $region12: #{tpu_custom_call.1} parent=1 // pred_region
      %s156 = ssub.s32 256, 256
      %157 = vsyncadd [#allocation3], %s156
      %s158 = sshll.u32 [#allocation2], 4
      %s159 = int_to_ptr.vmem [resolvable:$true] %s158
      %164 = dma.vmem_to_hbm [thread:$0]  %s159, 256, %s2, [#allocation3], 128, 128, 8
    $region13: #{tpu_custom_call.1} parent=1 // pred_fallthru
      _
    // Predicated region
    $region14: #{tpu_custom_call.1} parent=1 // pred_check
      _
    $region15: #{tpu_custom_call.1} parent=1 // pred_check_branch
      %166 = sbr.rel (0) target = $region17
    $region16: #{tpu_custom_call.1} parent=1 // pred_region
      %167 = dma.done [#allocation3], 256
    $region17: #{tpu_custom_call.1} parent=1 // pred_fallthru
      _
    %168 = vsyncpa [#allocation3], 1

</llo_original>
